<compile_context>
chip_gen: v7x
topology: tpu7x:2x2x1
jax: 0.10.0
libtpu: 0.0.40
codegen_flags: <defaults>
</compile_context>

<pallas_src>
import functools

import jax
import jax.numpy as jnp
from jax import lax
from jax.experimental import pallas as pl
from jax.experimental.pallas import tpu as pltpu

LANE_WIDTH = 128  # lane-dense slab width (one full lane group)


# --------------------------------------------------------------------------- #
# Device introspection (static, trace-time)
# --------------------------------------------------------------------------- #
def _device_kind():
    try:
        return jax.devices()[0].device_kind.lower()
    except Exception:  # pragma: no cover - defensive
        return ""


def _is_megacore(kind):
    # Chips exposing 2 TensorCores to a single program: v4, v5p, v7x.
    # v5e ("v5 lite") and v6e are single-core; v2/v3 expose cores as devices.
    if ("lite" in kind) or ("v5e" in kind) or ("v6" in kind) or ("v2" in kind) or ("v3" in kind):
        return False
    return ("v4" in kind) or ("v5" in kind) or ("v7" in kind)


def _has_bf16_vpu(kind):
    return ("v6" in kind) or ("v7" in kind)


# --------------------------------------------------------------------------- #
# Kernel
# --------------------------------------------------------------------------- #
def _pow_int(x, n):
    """x ** n for a static integer n >= 1, via square-and-multiply (VPU muls)."""
    acc = None
    sq = x
    while n:
        if n & 1:
            acc = sq if acc is None else acc * sq
        n >>= 1
        if n:
            sq = sq * sq
    return acc


def _ofl_kernel(y_pred_ref, y_true_ref, acc_ref, *, alpha, compute_dtype,
                steps_per_split, tile_rows, fold_rows, lane_width,
                valid_rows, first_masked_blk, mask_needed):
    # Zero this split's resident accumulator on its first reduction step.
    @pl.when(pl.program_id(1) == 0)
    def _():
        acc_ref[...] = jnp.zeros_like(acc_ref)

    # Cast inside the kernel; inputs arrive in their native dtype.
    yp = y_pred_ref[...].astype(compute_dtype)
    yt = y_true_ref[...].astype(compute_dtype)
    err = yt - yp
    base = jnp.abs(err)
    w = base + jnp.asarray(1.0, compute_dtype)

    # weights = (|err| + 1) ** alpha.  Small integer alpha -> VPU multiplies
    # (square-and-multiply); otherwise jnp.power (EUP exp+log, w >= 1 so safe).
    alpha_f = float(alpha)
    alpha_i = int(alpha_f)
    if alpha_f == float(alpha_i) and 0 <= alpha_i <= 32:
        weighted = base if alpha_i == 0 else _pow_int(w, alpha_i) * base
    else:
        weighted = jnp.power(w, jnp.asarray(alpha_f, compute_dtype)) * base

    # Accumulation is always f32, whatever the elementwise compute dtype.
    weighted = weighted.astype(jnp.float32)

    def fold(x):
        # (tile_rows, lane) -> (fold_rows, lane): regroups whole (8,128) vreg
        # tiles along a leading axis and adds them (pure VPU, no XLU).
        if fold_rows == tile_rows:
            return x
        return x.reshape(tile_rows // fold_rows, fold_rows, lane_width).sum(axis=0)

    if not mask_needed:
        acc_ref[...] += fold(weighted)
    else:
        blk = pl.program_id(0) * steps_per_split + pl.program_id(1)

        # Bulk blocks: mask-free fast path.
        @pl.when(blk < first_masked_blk)
        def _():
            acc_ref[...] += fold(weighted)

        # Boundary / over-coverage blocks: zero out rows past the array extent
        # (Pallas pads partial blocks with undefined values).
        @pl.when(blk >= first_masked_blk)
        def _():
            rid = blk * tile_rows + lax.broadcasted_iota(
                jnp.int32, (tile_rows, 1), 0)
            acc_ref[...] += fold(jnp.where(rid < valid_rows, weighted, 0.0))


# --------------------------------------------------------------------------- #
# Wrapper
# --------------------------------------------------------------------------- #
def outlier_focused_loss(y_pred, y_true, alpha, *, lane_width=LANE_WIDTH,
                         target_block_rows=None):
    """Pallas equivalent of OutlierFocusedLoss(alpha)(y_pred, y_true)."""
    assert y_pred.shape == y_true.shape, "y_pred / y_true must match in shape"
    y_pred = jnp.asarray(y_pred)
    y_true = jnp.asarray(y_true)

    kind = _device_kind()
    megacore = _is_megacore(kind)
    is_v7 = "v7" in kind

    # Keep each operand in its native floating dtype on the DMA path.
    def _native(x):
        return x if x.dtype.name in ("float32", "bfloat16", "float16") else x.astype(jnp.float32)

    y_pred = _native(y_pred)
    y_true = _native(y_true)

    total = int(y_pred.size)
    assert total > 0

    # bf16 elementwise math only when both operands are bf16 and the VPU
    # supports it (v6e / v7x); accumulation stays f32 in all cases.
    if (_has_bf16_vpu(kind)
            and y_pred.dtype.name == "bfloat16" and y_true.dtype.name == "bfloat16"):
        compute_dtype = jnp.bfloat16
    else:
        compute_dtype = jnp.float32

    # ---- flatten to a lane-dense 2-D slab (reshape is free when divisible) --
    flat_p = y_pred.reshape(-1)
    flat_t = y_true.reshape(-1)
    rem = total % lane_width
    if rem:
        # TODO(synk): this pad materializes a copy of both operands; a fully
        # pad-free ragged tail would need a 1-D block layout.  It only triggers
        # when N % 128 != 0 and pads < 128 elements (same value on both sides
        # -> err = 0 -> contributes exactly 0 to the sum).
        pad = lane_width - rem
        flat_p = jnp.pad(flat_p, (0, pad))
        flat_t = jnp.pad(flat_t, (0, pad))
    rows = pl.cdiv(total, lane_width)
    yp2 = flat_p.reshape(rows, lane_width)
    yt2 = flat_t.reshape(rows, lane_width)

    # ---- tile sizing ---------------------------------------------------------
    two_byte = (y_pred.dtype.itemsize < 4) or (y_true.dtype.itemsize < 4)
    g = 16 if two_byte else 8                       # sublane granularity of blocks
    target_elems = (1 << 20) if is_v7 else (1 << 19)  # elems per input block
    target_rows = max(g, (target_elems // lane_width) // g * g)
    if target_block_rows is not None:               # testing hook
        target_rows = max(g, (target_block_rows // g) * g)
    # tile_rows is either a multiple of g, or equals the full row extent.
    tile_rows = rows if rows <= target_rows else target_rows
    fold_rows = 8 if tile_rows % 8 == 0 else tile_rows

    total_blocks = pl.cdiv(rows, tile_rows)
    num_splits = 2 if (megacore and total_blocks >= 2) else 1
    steps_per_split = pl.cdiv(total_blocks, num_splits)
    padded_blocks = num_splits * steps_per_split

    mask_needed = padded_blocks * tile_rows > rows     # partial or over-covered blocks
    first_masked_blk = rows // tile_rows

    if padded_blocks > total_blocks:
        # Over-coverage (only possible with num_splits=2 and odd block count):
        # clamp the block index; the kernel masks that step's contribution to 0.
        in_map = lambda c, i: (jnp.minimum(c * steps_per_split + i, total_blocks - 1), 0)
    else:
        in_map = lambda c, i: (c * steps_per_split + i, 0)

    kernel = functools.partial(
        _ofl_kernel,
        alpha=float(alpha), compute_dtype=compute_dtype,
        steps_per_split=steps_per_split, tile_rows=tile_rows,
        fold_rows=fold_rows, lane_width=lane_width, valid_rows=rows,
        first_masked_blk=first_masked_blk, mask_needed=mask_needed)

    # ---- cost estimate (advisory) -------------------------------------------
    alpha_f = float(alpha)
    alpha_i = int(alpha_f)
    int_alpha = (alpha_f == float(alpha_i) and 0 <= alpha_i <= 32)
    flops_per_elem = 5 + (max(alpha_i, 1).bit_length() + 1 if int_alpha else 2)
    out_rows = num_splits * fold_rows
    cost = pl.CostEstimate(
        flops=int(total * flops_per_elem),
        transcendentals=0 if int_alpha else 2 * total,
        bytes_accessed=int(yp2.size * yp2.dtype.itemsize
                           + yt2.size * yt2.dtype.itemsize
                           + out_rows * lane_width * 4))

    vmem_limit = (48 if is_v7 else 32) * 1024 * 1024

    partials = pl.pallas_call(
        kernel,
        out_shape=jax.ShapeDtypeStruct((out_rows, lane_width), jnp.float32),
        grid_spec=pltpu.PrefetchScalarGridSpec(
            num_scalar_prefetch=0,
            grid=(num_splits, steps_per_split),
            in_specs=[
                pl.BlockSpec((tile_rows, lane_width), in_map),
                pl.BlockSpec((tile_rows, lane_width), in_map),
            ],
            # One small resident accumulator block per split (per core).
            out_specs=pl.BlockSpec((fold_rows, lane_width), lambda c, i: (c, 0)),
        ),
        compiler_params=pltpu.CompilerParams(
            dimension_semantics=("parallel", "arbitrary"),
            vmem_limit_bytes=vmem_limit,
        ),
        cost_estimate=cost,
    )(yp2, yt2)

    # Final tiny reduce + mean over the ORIGINAL element count.
    return jnp.sum(partials, dtype=jnp.float32) / jnp.float32(total)


# --------------------------------------------------------------------------- #
# Reference + self-test
# --------------------------------------------------------------------------- #
def _reference_loss(y_pred, y_true, alpha):
    err = y_true.astype(jnp.float32) - y_pred.astype(jnp.float32)
    base = jnp.abs(err)
    w = jnp.power(base + 1.0, jnp.float32(alpha))
    return jnp.mean(w * base)


if __name__ == "__main__":
    key = jax.random.PRNGKey(0)
    k1, k2, k3, k4 = jax.random.split(key, 4)
    alpha = 2.0  # self.alpha

    # 1) Small NCHW regression-style input (2, 4, 16, 16), f32.
    shape = (2, 4, 16, 16)
    y_pred = jax.random.normal(k1, shape, dtype=jnp.float32)
    y_true = jax.random.normal(k2, shape, dtype=jnp.float32)
    loss = jax.block_until_ready(outlier_focused_loss(y_pred, y_true, alpha))
    ref = jax.block_until_ready(_reference_loss(y_pred, y_true, alpha))
    assert jnp.allclose(loss, ref, rtol=1e-5, atol=1e-6), (loss, ref)

    # 2) Ragged shape + forced small tiles: exercises the sub-lane pad, the
    #    partial-block row mask, and (on megacore chips) index-map clamping.
    shape2 = (17, 173)  # 2941 elements, not a multiple of 128
    y_pred2 = jax.random.normal(k3, shape2, dtype=jnp.float32)
    y_true2 = jax.random.normal(k4, shape2, dtype=jnp.float32)
    loss2 = jax.block_until_ready(
        outlier_focused_loss(y_pred2, y_true2, alpha, target_block_rows=8))
    ref2 = jax.block_until_ready(_reference_loss(y_pred2, y_true2, alpha))
    assert jnp.allclose(loss2, ref2, rtol=1e-5, atol=1e-6), (loss2, ref2)

    # 3) bf16 operands (bf16 elementwise math on v6e/v7x, f32 accumulate);
    #    looser tolerance to cover the 16-bit compute path.
    y_pred3 = y_pred.astype(jnp.bfloat16)
    y_true3 = y_true.astype(jnp.bfloat16)
    loss3 = jax.block_until_ready(outlier_focused_loss(y_pred3, y_true3, alpha))
    ref3 = jax.block_until_ready(_reference_loss(y_pred3, y_true3, alpha))
    assert jnp.allclose(loss3, ref3, rtol=5e-2, atol=1e-3), (loss3, ref3)

    print("KERNEL_OK")
</pallas_src>

<mosaic_0001>
module attributes {stable_mosaic.version = 11 : i64} {
  func.func @_ofl_kernel(%arg0: i32, %arg1: i32, %arg2: memref<16x128xf32, #tpu.memory_space<vmem>>, %arg3: memref<16x128xf32, #tpu.memory_space<vmem>>, %arg4: memref<8x128xf32, #tpu.memory_space<vmem>>) attributes {dimension_semantics = [#tpu.dimension_semantics<parallel>, #tpu.dimension_semantics<arbitrary>], iteration_bounds = array<i64: 1, 1>, scalar_prefetch = 0 : i64, scratch_operands = 0 : i64, tpu.core_type = #tpu.core_type<tc>, window_params = [{transform_indices = @transform_0, window_bounds = array<i64: 16, 128>}, {transform_indices = @transform_1, window_bounds = array<i64: 16, 128>}, {transform_indices = @transform_2, window_bounds = array<i64: 8, 128>}]} {
    %c0_i32 = arith.constant 0 : i32
    %0 = arith.cmpi eq, %arg1, %c0_i32 : i32
    %1 = arith.extui %0 : i1 to i32
    %c0_i32_0 = arith.constant 0 : i32
    %2 = arith.cmpi ne, %1, %c0_i32_0 : i32
    scf.if %2 {
      %cst_9 = arith.constant 0.000000e+00 : f32
      %16 = vector.broadcast %cst_9 : f32 to vector<8x128xf32>
      %c0_10 = arith.constant 0 : index
      %c0_11 = arith.constant 0 : index
      %17 = vector.load %arg4[%c0_10, %c0_11] : memref<8x128xf32, #tpu.memory_space<vmem>>, vector<8x128xf32>
      tpu.vector_store %arg4[%c0_10, %c0_11], %16 {strides = array<i32>} : memref<8x128xf32, #tpu.memory_space<vmem>>, vector<8x128xf32>,
    } else {
    }
    %c0 = arith.constant 0 : index
    %c0_1 = arith.constant 0 : index
    %3 = vector.load %arg2[%c0, %c0_1] : memref<16x128xf32, #tpu.memory_space<vmem>>, vector<16x128xf32>
    %c0_2 = arith.constant 0 : index
    %c0_3 = arith.constant 0 : index
    %4 = vector.load %arg3[%c0_2, %c0_3] : memref<16x128xf32, #tpu.memory_space<vmem>>, vector<16x128xf32>
    %5 = arith.subf %4, %3 : vector<16x128xf32>
    %6 = math.absf %5 : vector<16x128xf32>
    %cst = arith.constant 1.000000e+00 : f32
    %7 = vector.broadcast %cst : f32 to vector<16x128xf32>
    %8 = arith.addf %6, %7 : vector<16x128xf32>
    %9 = arith.mulf %8, %8 : vector<16x128xf32>
    %10 = arith.mulf %9, %6 : vector<16x128xf32>
    %c0_4 = arith.constant 0 : index
    %c0_5 = arith.constant 0 : index
    %11 = vector.load %arg4[%c0_4, %c0_5] : memref<8x128xf32, #tpu.memory_space<vmem>>, vector<8x128xf32>
    %12 = vector.shape_cast %10 : vector<16x128xf32> to vector<2x8x128xf32>
    %cst_6 = arith.constant dense<0.000000e+00> : vector<8x128xf32>
    %13 = vector.multi_reduction <add>, %12, %cst_6 [0] : vector<2x8x128xf32> to vector<8x128xf32>
    %14 = arith.addf %11, %13 : vector<8x128xf32>
    %c0_7 = arith.constant 0 : index
    %c0_8 = arith.constant 0 : index
    %15 = vector.load %arg4[%c0_7, %c0_8] : memref<8x128xf32, #tpu.memory_space<vmem>>, vector<8x128xf32>
    tpu.vector_store %arg4[%c0_7, %c0_8], %14 {strides = array<i32>} : memref<8x128xf32, #tpu.memory_space<vmem>>, vector<8x128xf32>,
    return
  }
  func.func @transform_0(%arg0: i32, %arg1: i32) -> (i32, i32) {
    %c1_i32 = arith.constant 1 : i32
    %0 = arith.muli %arg0, %c1_i32 : i32
    %1 = arith.addi %0, %arg1 : i32
    %c0_i32 = arith.constant 0 : i32
    %c0_i32_0 = arith.constant 0 : i32
    return %1, %c0_i32 : i32, i32
  }
  func.func @transform_1(%arg0: i32, %arg1: i32) -> (i32, i32) {
    %c1_i32 = arith.constant 1 : i32
    %0 = arith.muli %arg0, %c1_i32 : i32
    %1 = arith.addi %0, %arg1 : i32
    %c0_i32 = arith.constant 0 : i32
    %c0_i32_0 = arith.constant 0 : i32
    return %1, %c0_i32 : i32, i32
  }
  func.func @transform_2(%arg0: i32, %arg1: i32) -> (i32, i32) {
    %c0_i32 = arith.constant 0 : i32
    %c0_i32_0 = arith.constant 0 : i32
    return %arg0, %c0_i32 : i32, i32
  }
}

</mosaic_0001>

<llo_original>
// kernel: tpu_custom_call.1
$region0: #{tpu_custom_call.1}
  #allocation0 [shape = 'u32[]', space=smem, size = 0x4, offset = 0x4, fixed_abs, tag = 'smem constant byte address 0x4 - core index']
  #allocation1 [shape = 'u32[144,128]{1,0:T(1,128)}', space=vmem, size = 0x12000, scoped, tag = 'internal scratch']
  %s0 = inlined_call_operand.hbm [shape: f32[16,128], index: 0, kind: input, shape index: {}]
  %s1 = inlined_call_operand.hbm [shape: f32[16,128], index: 1, kind: input, shape index: {}]
  %s2 = inlined_call_operand.hbm [shape: f32[8,128], index: 2, kind: output, shape index: {}]
  %s3 = sld [smem:[#allocation0]]
  $region30: #{tpu_custom_call.1} parent=0
    _
  %s5 = ssub.s32 1, %s3
  %s6 = scalar_select 0, %s5, %s3
  $region1: #{tpu_custom_call.1} parent=0
    #allocation2 [shape = 'u8[8192]{0}', space=vmem, size = 0x2000, scoped, tag = 'input window, operand 0, single buffered']
    #allocation3 [shape = 's32[1]{0}', space=sflag, size = 0x4, scoped, tag = 'scoped memory for tpu_custom_call.1']
    #allocation4 [shape = 's32[1]{0}', space=sflag, size = 0x4, scoped, tag = 'scoped memory for tpu_custom_call.1']
    #allocation5 [shape = 'u8[8192]{0}', space=vmem, size = 0x2000, scoped, tag = 'input window, operand 1, single buffered']
    #allocation6 [shape = 's32[1]{0}', space=sflag, size = 0x4, scoped, tag = 'scoped memory for tpu_custom_call.1']
    #allocation7 [shape = 'u8[4096]{0}', space=vmem, size = 0x1000, scoped, tag = 'output window, operand 0, single buffered']
    %7 = vsyncpa [#allocation3], 0
    %8 = vsyncpa [#allocation6], 0
    %9 = vsyncpa [#allocation4], 0
    // Predicated region
    $region2: #{tpu_custom_call.1} parent=1 // pred_check
      _
    $region3: #{tpu_custom_call.1} parent=1 // pred_check_branch
      %11 = sbr.rel (0) target = $region5
    $region4: #{tpu_custom_call.1} parent=1 // pred_region
      %s12 = sadd.s32 0, 0
      %s13 = smul.u32 2, %s12
      %s15 = ssub.s32 256, 256
      %16 = vsyncadd [#allocation3], %s15
      %s17 = smul.addr %s13, 128
      %s18 = scalar_lea.hbm %s0, %s17
      %s19 = sshll.u32 [#allocation2], 4
      %s20 = int_to_ptr.vmem [resolvable:$true] %s19
      %25 = dma.hbm_to_vmem [thread:$0]  %s18, 256, %s20, [#allocation3], 128, 128, 8
    $region5: #{tpu_custom_call.1} parent=1 // pred_fallthru
      _
    // Predicated region
    $region6: #{tpu_custom_call.1} parent=1 // pred_check
      _
    $region7: #{tpu_custom_call.1} parent=1 // pred_check_branch
      %27 = sbr.rel (0) target = $region9
    $region8: #{tpu_custom_call.1} parent=1 // pred_region
      %s28 = sadd.s32 0, 0
      %s29 = smul.u32 2, %s28
      %s31 = ssub.s32 256, 256
      %32 = vsyncadd [#allocation6], %s31
      %s33 = smul.addr %s29, 128
      %s34 = scalar_lea.hbm %s1, %s33
      %s35 = sshll.u32 [#allocation5], 4
      %s36 = int_to_ptr.vmem [resolvable:$true] %s35
      %41 = dma.hbm_to_vmem [thread:$0]  %s34, 256, %s36, [#allocation6], 128, 128, 8
    $region9: #{tpu_custom_call.1} parent=1 // pred_fallthru
      _
    // Predicated region
    $region10: #{tpu_custom_call.1} parent=1 // pred_check
      _
    $region11: #{tpu_custom_call.1} parent=1 // pred_check_branch
      %43 = sbr.rel (0) target = $region13
    $region12: #{tpu_custom_call.1} parent=1 // pred_region
      %44 = dma.done [#allocation3], 256
    $region13: #{tpu_custom_call.1} parent=1 // pred_fallthru
      _
    // Predicated region
    $region14: #{tpu_custom_call.1} parent=1 // pred_check
      _
    $region15: #{tpu_custom_call.1} parent=1 // pred_check_branch
      %46 = sbr.rel (0) target = $region17
    $region16: #{tpu_custom_call.1} parent=1 // pred_region
      %47 = dma.done [#allocation6], 256
    $region17: #{tpu_custom_call.1} parent=1 // pred_fallthru
      _
    %s48 = sadd.s32 0, 0
    %s49 = smul.u32 2, %s48
    %s50 = sadd.s32 0, 0
    %s51 = smul.u32 2, %s50
    %p52 = scmp.eq.s32.totalorder 0, 0
    // Predicated region
    $region18: #{tpu_custom_call.1} parent=1 // pred_check
      %p53 = pneg %p52
    $region19: #{tpu_custom_call.1} parent=1 // pred_check_branch
      %55 = sbr.rel (%p53) target = $region21
    $region20: #{tpu_custom_call.1} parent=1 // pred_region
      %56 = vst [vmem:[#allocation7] sm:$0xff] 0.0
    $region21: #{tpu_custom_call.1} parent=1 // pred_fallthru
      _
    %v57 = vld [vmem:[#allocation2] sm:$0xff]
    %v58 = vld [vmem:[#allocation2 + $0x8] sm:$0xff]
    %v59 = vld [vmem:[#allocation5] sm:$0xff]
    %v60 = vld [vmem:[#allocation5 + $0x8] sm:$0xff]
    %v61 = vsub.f32 %v59, %v57
    %v62 = vsub.f32 %v60, %v58
    %v63 = vand.u32 2147483647, %v61
    %v64 = vand.u32 2147483647, %v62
    %v65 = vadd.f32 %v63, 1.0
    %v66 = vadd.f32 %v64, 1.0
    %v67 = vmul.f32 %v65, %v65
    %v68 = vmul.f32 %v66, %v66
    %v69 = vmul.f32 %v67, %v63
    %v70 = vmul.f32 %v68, %v64
    %v71 = vld [vmem:[#allocation7] sm:$0xff]
    %v72 = vadd.f32 %v69, %v70
    %v73 = vadd.f32 %v71, %v72
    %74 = vst [vmem:[#allocation7] sm:$0xff] %v73
    // Predicated region
    $region22: #{tpu_custom_call.1} parent=1 // pred_check
      _
    $region23: #{tpu_custom_call.1} parent=1 // pred_check_branch
      %76 = sbr.rel (0) target = $region25
    $region24: #{tpu_custom_call.1} parent=1 // pred_region
      %s78 = ssub.s32 128, 128
      %79 = vsyncadd [#allocation4], %s78
      %s81 = sshll.u32 [#allocation7], 4
      %s82 = int_to_ptr.vmem [resolvable:$true] %s81
      %84 = dma.vmem_to_hbm [thread:$0]  %s82, 128, %s2, [#allocation4]
    $region25: #{tpu_custom_call.1} parent=1 // pred_fallthru
      _
    // Predicated region
    $region26: #{tpu_custom_call.1} parent=1 // pred_check
      _
    $region27: #{tpu_custom_call.1} parent=1 // pred_check_branch
      %86 = sbr.rel (0) target = $region29
    $region28: #{tpu_custom_call.1} parent=1 // pred_region
      %87 = dma.done [#allocation4], 128
    $region29: #{tpu_custom_call.1} parent=1 // pred_fallthru
      _
    %88 = vsyncpa [#allocation3], 1
    %89 = vsyncpa [#allocation6], 1
    %90 = vsyncpa [#allocation4], 1

</llo_original>
